<compile_context>
chip_gen: v7x
topology: tpu7x:2x2x1
jax: 0.10.0
libtpu: 0.0.40
codegen_flags: <defaults>
</compile_context>

<pallas_src>
import jax
import jax.numpy as jnp
from jax.experimental import pallas as pl
from jax.experimental.pallas import tpu as pltpu


# ----------------------------- Pallas kernel -------------------------------

def _emit_kernel(x_ref, b_ref, o_ref):
    # x_ref: (TM, S)        row tile of flattened (batch*length) class inputs
    # b_ref: (K, S, Q)      full transposed (intron-expanded) emission matrix
    # o_ref: (K, TM, Q)     emission probabilities for this row tile, all models
    x = x_ref[...]
    num_models = b_ref.shape[0]          # static
    for k in range(num_models):
        o_ref[k] = jnp.dot(
            x, b_ref[k], preferred_element_type=jnp.float32
        ).astype(o_ref.dtype)


def _round_up(x, m):
    return ((x + m - 1) // m) * m


_LANE = 128
_SUBLANE = 8
_VMEM_CAP = 40 << 20       # conservative cap (v7x has 64 MiB physical / TC)
_TILE_CAP = 8192           # rows per grid step (diminishing returns above)


def _choose_tile_m(M, K, S, Q, budget_bytes):
    """Largest 8-aligned row tile whose double-buffered, lane-padded footprint
    (x tile + output tile + resident B) fits in `budget_bytes`."""
    per_row = (2 * _round_up(S, _LANE) * 4            # x tile, double-buffered
               + 2 * K * _round_up(Q, _LANE) * 4)     # out tile, double-buffered
    b_bytes = 2 * K * _round_up(S, _SUBLANE) * _round_up(Q, _LANE) * 4
    avail = budget_bytes - b_bytes - (2 << 20)        # headroom for scratch
    tile = max(_SUBLANE, (avail // per_row) // _SUBLANE * _SUBLANE)
    tile = min(tile, _TILE_CAP)
    if M <= tile:
        return M                                       # full-extent block is legal
    return tile


def emission_matmul(x_flat, b_t):
    """out[k] = x_flat @ b_t[k].

    x_flat: (M, S) float32
    b_t:    (K, S, Q) float32
    returns (K, M, Q) float32
    """
    M, S = x_flat.shape
    K, S2, Q = b_t.shape
    assert S == S2

    tile_m = _choose_tile_m(M, K, S, Q, _VMEM_CAP)
    grid = (pl.cdiv(M, tile_m),)

    # Explicit VMEM budget with 128-lane padding (f32), double-buffered.
    x_tile_bytes = tile_m * _round_up(S, _LANE) * 4
    o_tile_bytes = K * tile_m * _round_up(Q, _LANE) * 4
    b_bytes = K * _round_up(S, _SUBLANE) * _round_up(Q, _LANE) * 4
    vmem_bytes = 2 * (x_tile_bytes + o_tile_bytes) + 2 * b_bytes + (2 << 20)
    vmem_bytes = int(min(max(vmem_bytes, 16 << 20), _VMEM_CAP))

    return pl.pallas_call(
        _emit_kernel,
        out_shape=jax.ShapeDtypeStruct((K, M, Q), x_flat.dtype),
        grid=grid,
        in_specs=[
            pl.BlockSpec((tile_m, S), lambda i: (i, 0)),
            pl.BlockSpec((K, S, Q), lambda i: (0, 0, 0)),   # fully VMEM resident
        ],
        out_specs=pl.BlockSpec((K, tile_m, Q), lambda i: (0, i, 0)),
        compiler_params=pltpu.CompilerParams(
            dimension_semantics=("parallel",),
            vmem_limit_bytes=vmem_bytes),
    )(x_flat, b_t)


# --------------------------- Module (JAX glue) ------------------------------

class SimpleGenePredHMMEmitterPallas:
    """JAX/Pallas port of SimpleGenePredHMMEmitter (emit_embeddings=False)."""

    def __init__(self, num_models=1, num_copies=1, init=0.0,
                 share_intron_parameters=True, alphabet_size=16, seed=0):
        self.num_models = num_models
        self.num_copies = num_copies
        self.num_states = 1 + 6 * num_copies
        self.share_intron_parameters = share_intron_parameters
        q_red = self.num_states - 2 * num_copies * int(share_intron_parameters)
        # Deterministic in-script parameter init (torch.full(init) would make
        # the softmax exactly uniform, so a small deterministic perturbation
        # around `init` is used instead to make the check non-trivial).
        key = jax.random.PRNGKey(seed)
        self.emission_kernel = init + 0.1 * jax.random.normal(
            key, (num_models, q_red, alphabet_size), dtype=jnp.float32)

    def make_B(self):
        return jax.nn.softmax(self.emission_kernel, axis=-1)

    def _expanded_B(self):
        """Emission matrix with intron columns duplicated (if shared)."""
        B = self.make_B()                                      # (K, q_red, S)
        nc = self.num_copies
        if self.share_intron_parameters:
            B = jnp.concatenate(
                [B[:, :1 + nc], B[:, 1:1 + nc], B[:, 1:1 + nc], B[:, 1 + nc:]],
                axis=1)                                        # (K, num_states, S)
        return B

    def __call__(self, inputs, end_hints=None):
        """inputs:    (num_models, batch, length, alphabet_size)
        end_hints:    optional (num_models, batch, 2, num_states)
        returns:      (num_models, batch, length, num_states)"""
        B_full = self._expanded_B()                            # (K, Q, S)
        K, Q, S = B_full.shape
        x = inputs[0]                                          # (batch, length, S)
        batch, length, _ = x.shape

        x_flat = x.reshape(batch * length, S)                  # rows = batch*length
        b_t = jnp.transpose(B_full, (0, 2, 1))                 # (K, S, Q)  tiny

        emit_flat = emission_matmul(x_flat, b_t)               # (K, M, Q)  Pallas
        emit = emit_flat.reshape(K, batch, length, Q)

        if end_hints is not None:
            # In-place boundary scaling (no full-output concatenate).
            emit = emit.at[..., 0, :].multiply(end_hints[..., 0, :])
            emit = emit.at[..., -1, :].multiply(end_hints[..., 1, :])
        return emit


# ------------------------------- reference ----------------------------------

def reference_forward(module, inputs, end_hints=None):
    B = module.make_B()
    emit = jnp.einsum('...s,kqs->k...q', inputs[0], B)
    nc = module.num_copies
    if module.share_intron_parameters:
        emit = jnp.concatenate(
            [emit[..., :1 + nc], emit[..., 1:1 + nc], emit[..., 1:1 + nc],
             emit[..., 1 + nc:]], axis=-1)
    if end_hints is not None:
        left = end_hints[..., :1, :] * emit[..., :1, :]
        right = end_hints[..., 1:, :] * emit[..., -1:, :]
        emit = jnp.concatenate([left, emit[..., 1:-1, :], right], axis=-2)
    return emit


# --------------------------------- main --------------------------------------

if __name__ == "__main__":
    num_models, num_copies = 1, 1
    batch, length, alphabet = 2, 32, 16
    num_states = 1 + 6 * num_copies

    module = SimpleGenePredHMMEmitterPallas(
        num_models=num_models, num_copies=num_copies, init=0.0,
        share_intron_parameters=True, alphabet_size=alphabet, seed=0)

    key = jax.random.PRNGKey(0)
    k_in, k_hint = jax.random.split(key)
    # class-probability-like inputs
    inputs = jax.nn.softmax(
        jax.random.normal(k_in, (num_models, batch, length, alphabet),
                          dtype=jnp.float32), axis=-1)
    end_hints = jax.random.uniform(
        k_hint, (num_models, batch, 2, num_states), dtype=jnp.float32)

    out = module(inputs, end_hints=end_hints)
    out = jax.block_until_ready(out)

    ref = reference_forward(module, inputs, end_hints=end_hints)
    assert out.shape == (num_models, batch, length, num_states), out.shape
    assert jnp.allclose(out, ref, atol=1e-5, rtol=1e-5), "mismatch vs reference"

    # Also check the path without end_hints.
    out2 = jax.block_until_ready(module(inputs))
    ref2 = reference_forward(module, inputs)
    assert jnp.allclose(out2, ref2, atol=1e-5, rtol=1e-5), "mismatch (no hints)"

    print("KERNEL_OK")
</pallas_src>

<mosaic_0001>
module attributes {stable_mosaic.version = 11 : i64} {
  func.func @_emit_kernel(%arg0: i32, %arg1: memref<64x16xf32, #tpu.memory_space<vmem>>, %arg2: memref<1x16x7xf32, #tpu.memory_space<vmem>>, %arg3: memref<1x64x7xf32, #tpu.memory_space<vmem>>) attributes {dimension_semantics = [#tpu.dimension_semantics<parallel>], iteration_bounds = array<i64: 1>, scalar_prefetch = 0 : i64, scratch_operands = 0 : i64, tpu.core_type = #tpu.core_type<tc>, window_params = [{transform_indices = @transform_0, window_bounds = array<i64: 64, 16>}, {pipeline_mode = #tpu.pipeline_mode<synchronous>, transform_indices = @transform_1, window_bounds = array<i64: 1, 16, 7>}, {transform_indices = @transform_2, window_bounds = array<i64: 1, 64, 7>}]} {
    %c0 = arith.constant 0 : index
    %c0_0 = arith.constant 0 : index
    %0 = vector.load %arg1[%c0, %c0_0] : memref<64x16xf32, #tpu.memory_space<vmem>>, vector<64x16xf32>
    %c0_1 = arith.constant 0 : index
    %c0_2 = arith.constant 0 : index
    %c0_3 = arith.constant 0 : index
    %1 = vector.load %arg2[%c0_1, %c0_2, %c0_3] : memref<1x16x7xf32, #tpu.memory_space<vmem>>, vector<1x16x7xf32>
    %2 = vector.shape_cast %1 : vector<1x16x7xf32> to vector<16x7xf32>
    %cst = arith.constant dense<0.000000e+00> : vector<64x7xf32>
    %3 = tpu.matmul %0, %2, %cst {dimension_numbers = #tpu.dot_dimension_numbers<[1], [0], [0], [1], [0, 0, 1, 1], [], []>} : vector<64x16xf32>, vector<16x7xf32>, vector<64x7xf32> -> vector<64x7xf32>
    %c0_4 = arith.constant 0 : index
    %c0_5 = arith.constant 0 : index
    %c0_6 = arith.constant 0 : index
    %4 = vector.load %arg3[%c0_4, %c0_5, %c0_6] : memref<1x64x7xf32, #tpu.memory_space<vmem>>, vector<1x64x7xf32>
    %5 = vector.shape_cast %4 : vector<1x64x7xf32> to vector<64x7xf32>
    %6 = vector.shape_cast %3 : vector<64x7xf32> to vector<1x64x7xf32>
    tpu.vector_store %arg3[%c0_4, %c0_5, %c0_6], %6 {strides = array<i32>} : memref<1x64x7xf32, #tpu.memory_space<vmem>>, vector<1x64x7xf32>,
    return
  }
  func.func @transform_0(%arg0: i32) -> (i32, i32) {
    %c0_i32 = arith.constant 0 : i32
    %c0_i32_0 = arith.constant 0 : i32
    return %arg0, %c0_i32 : i32, i32
  }
  func.func @transform_1(%arg0: i32) -> (i32, i32, i32) {
    %c0_i32 = arith.constant 0 : i32
    %c0_i32_0 = arith.constant 0 : i32
    %c0_i32_1 = arith.constant 0 : i32
    %c0_i32_2 = arith.constant 0 : i32
    return %c0_i32, %c0_i32_0, %c0_i32_1 : i32, i32, i32
  }
  func.func @transform_2(%arg0: i32) -> (i32, i32, i32) {
    %c0_i32 = arith.constant 0 : i32
    %c0_i32_0 = arith.constant 0 : i32
    %c0_i32_1 = arith.constant 0 : i32
    return %c0_i32, %arg0, %c0_i32_0 : i32, i32, i32
  }
}

</mosaic_0001>

<llo_original>
// kernel: tpu_custom_call.1
$region0: #{tpu_custom_call.1}
  #allocation0 [shape = 'u32[]', space=smem, size = 0x4, offset = 0x4, fixed_abs, tag = 'smem constant byte address 0x4 - core index']
  #allocation1 [shape = 'u32[144,128]{1,0:T(1,128)}', space=vmem, size = 0x12000, scoped, tag = 'internal scratch']
  %s0 = inlined_call_operand.vmem [shape: f32[64,16], index: 0, kind: input, shape index: {}]
  %s1 = inlined_call_operand.vmem [shape: f32[1,16,7], index: 1, kind: input, shape index: {}]
  %s2 = inlined_call_operand.vmem [shape: f32[1,64,7], index: 2, kind: output, shape index: {}]
  %s3 = sld [smem:[#allocation0]]
  $region18: #{tpu_custom_call.1} parent=0
    _
  %s5 = ssub.s32 1, %s3
  %s6 = scalar_select 0, %s5, %s3
  // Predicated region
  $region2: #{tpu_custom_call.1} parent=0 // pred_check
    _
  $region3: #{tpu_custom_call.1} parent=0 // pred_check_branch
    %8 = sbr.rel (0) target = $region5
  $region4: #{tpu_custom_call.1} parent=0 // pred_region
    _
  $region5: #{tpu_custom_call.1} parent=0 // pred_fallthru
    _
  // Predicated region
  $region6: #{tpu_custom_call.1} parent=0 // pred_check
    _
  $region7: #{tpu_custom_call.1} parent=0 // pred_check_branch
    %10 = sbr.rel (0) target = $region9
  $region8: #{tpu_custom_call.1} parent=0 // pred_region
    _
  $region9: #{tpu_custom_call.1} parent=0 // pred_fallthru
    _
  %v11 = vld [vmem:[%s0] sm:$0xff]
  %v12 = vld [vmem:[%s0 + $0x8] sm:$0xff]
  %v13 = vld [vmem:[%s0 + $0x10] sm:$0xff]
  %v14 = vld [vmem:[%s0 + $0x18] sm:$0xff]
  %v15 = vld [vmem:[%s0 + $0x20] sm:$0xff]
  %v16 = vld [vmem:[%s0 + $0x28] sm:$0xff]
  %v17 = vld [vmem:[%s0 + $0x30] sm:$0xff]
  %v18 = vld [vmem:[%s0 + $0x38] sm:$0xff]
  %v19 = vld [vmem:[%s1] sm:$0xff]
  %v20 = vld [vmem:[%s1 + $0x8] sm:$0xff]
  %vm21 = vcmask 130048
  %v23 = vsel %vm21, %v11, 0
  %v26 = vsel %vm21, %v12, 0
  %v29 = vsel %vm21, %v13, 0
  %v32 = vsel %vm21, %v14, 0
  %v35 = vsel %vm21, %v15, 0
  %v38 = vsel %vm21, %v16, 0
  %v41 = vsel %vm21, %v17, 0
  %v44 = vsel %vm21, %v18, 0
  %46 = vmatprep.subr.mxu0 0.0
  %47 = vmatpush1.msra.mxu0 %v19
  %48 = vmatprep.subr.mxu0 0.0
  %49 = vmatpush1.msra.mxu0 %v20
  %50 = vmatprep.subr.mxu0 0.0
  %51 = vmatpush1.msra.mxu0 0.0
  %52 = vmatprep.subr.mxu0 0.0
  %53 = vmatpush1.msra.mxu0 0.0
  %54 = vmatprep.subr.mxu0 0.0
  %55 = vmatpush1.msra.mxu0 0.0
  %56 = vmatprep.subr.mxu0 0.0
  %57 = vmatpush1.msra.mxu0 0.0
  %58 = vmatprep.subr.mxu0 0.0
  %59 = vmatpush1.msra.mxu0 0.0
  %60 = vmatprep.subr.mxu0 0.0
  %61 = vmatpush1.msra.mxu0 0.0
  %62 = vmatprep.subr.mxu0 0.0
  %63 = vmatpush1.msra.mxu0 0.0
  %64 = vmatprep.subr.mxu0 0.0
  %65 = vmatpush1.msra.mxu0 0.0
  %66 = vmatprep.subr.mxu0 0.0
  %67 = vmatpush1.msra.mxu0 0.0
  %68 = vmatprep.subr.mxu0 0.0
  %69 = vmatpush1.msra.mxu0 0.0
  %70 = vmatprep.subr.mxu0 0.0
  %71 = vmatpush1.msra.mxu0 0.0
  %72 = vmatprep.subr.mxu0 0.0
  %73 = vmatpush1.msra.mxu0 0.0
  %74 = vmatprep.subr.mxu0 0.0
  %75 = vmatpush1.msra.mxu0 0.0
  %76 = vmatprep.subr.mxu0 0.0
  %77 = vmatpush1.msra.mxu0 0.0
  %78 = vmatprep.subr.mxu0 0.0
  %79 = vmatpush1.msra.mxu0 0.0
  %80 = vmatprep.subr.mxu0 0.0
  %81 = vmatpush1.msra.mxu0 0.0
  %82 = vmatprep.subr.mxu0 0.0
  %83 = vmatpush1.msra.mxu0 0.0
  %84 = vmatprep.subr.mxu0 0.0
  %85 = vmatpush1.msra.mxu0 0.0
  %86 = vmatprep.subr.mxu0 0.0
  %87 = vmatpush1.msra.mxu0 0.0
  %88 = vmatprep.subr.mxu0 0.0
  %89 = vmatpush1.msra.mxu0 0.0
  %90 = vmatprep.subr.mxu0 0.0
  %91 = vmatpush1.msra.mxu0 0.0
  %92 = vmatprep.subr.mxu0 0.0
  %93 = vmatpush1.msra.mxu0 0.0
  %94 = vmatprep.subr.mxu0 0.0
  %95 = vmatpush1.msra.mxu0 0.0
  %96 = vmatprep.subr.mxu0 0.0
  %97 = vmatpush1.msra.mxu0 0.0
  %98 = vmatprep.subr.mxu0 0.0
  %99 = vmatpush1.msra.mxu0 0.0
  %100 = vmatprep.subr.mxu0 0.0
  %101 = vmatpush1.msra.mxu0 0.0
  %102 = vmatprep.subr.mxu0 0.0
  %103 = vmatpush1.msra.mxu0 0.0
  %104 = vmatprep.subr.mxu0 0.0
  %105 = vmatpush1.msra.mxu0 0.0
  %106 = vmatprep.subr.mxu0 0.0
  %107 = vmatpush1.msra.mxu0 0.0
  %108 = vmatprep.subr.mxu0 0.0
  %109 = vmatpush1.msra.mxu0 0.0
  %110 = vmatprep.mubr.f32.mxu0 0.0
  %111 = vmatmul.mubr.f32.gmra.mrb[0].mxu0 %v23
  %v112 = vpop.f32.mrb[0].mxu0
  %v113 = vadd.f32 0.0, %v112
  %v114 = vpop.f32.mrb[0].mxu0
  %115 = vmatprep.mubr.f32.mxu0 0.0
  %116 = vmatmul.mubr.f32.gmra.mrb[0].mxu0 %v26
  %v117 = vpop.f32.mrb[0].mxu0
  %v118 = vadd.f32 0.0, %v117
  %v119 = vpop.f32.mrb[0].mxu0
  %120 = vmatprep.mubr.f32.mxu0 0.0
  %121 = vmatmul.mubr.f32.gmra.mrb[0].mxu0 %v29
  %v122 = vpop.f32.mrb[0].mxu0
  %v123 = vadd.f32 0.0, %v122
  %v124 = vpop.f32.mrb[0].mxu0
  %125 = vmatprep.mubr.f32.mxu0 0.0
  %126 = vmatmul.mubr.f32.gmra.mrb[0].mxu0 %v32
  %v127 = vpop.f32.mrb[0].mxu0
  %v128 = vadd.f32 0.0, %v127
  %v129 = vpop.f32.mrb[0].mxu0
  %130 = vmatprep.mubr.f32.mxu0 0.0
  %131 = vmatmul.mubr.f32.gmra.mrb[0].mxu0 %v35
  %v132 = vpop.f32.mrb[0].mxu0
  %v133 = vadd.f32 0.0, %v132
  %v134 = vpop.f32.mrb[0].mxu0
  %135 = vmatprep.mubr.f32.mxu0 0.0
  %136 = vmatmul.mubr.f32.gmra.mrb[0].mxu0 %v38
  %v137 = vpop.f32.mrb[0].mxu0
  %v138 = vadd.f32 0.0, %v137
  %v139 = vpop.f32.mrb[0].mxu0
  %140 = vmatprep.mubr.f32.mxu0 0.0
  %141 = vmatmul.mubr.f32.gmra.mrb[0].mxu0 %v41
  %v142 = vpop.f32.mrb[0].mxu0
  %v143 = vadd.f32 0.0, %v142
  %v144 = vpop.f32.mrb[0].mxu0
  %145 = vmatprep.mubr.f32.mxu0 0.0
  %146 = vmatmul.mubr.f32.gmra.mrb[0].mxu0 %v44
  %v147 = vpop.f32.mrb[0].mxu0
  %v148 = vadd.f32 0.0, %v147
  %v149 = vpop.f32.mrb[0].mxu0
  %150 = vdwg.mxu0
  %vm151 = vcmask 56320
  %152 = vst.msk [vmem:[%s2] sm:$0xff] %vm151, %v113
  %153 = vst.msk [vmem:[%s2 + $0x8] sm:$0xff] %vm151, %v118
  %154 = vst.msk [vmem:[%s2 + $0x10] sm:$0xff] %vm151, %v123
  %155 = vst.msk [vmem:[%s2 + $0x18] sm:$0xff] %vm151, %v128
  %156 = vst.msk [vmem:[%s2 + $0x20] sm:$0xff] %vm151, %v133
  %157 = vst.msk [vmem:[%s2 + $0x28] sm:$0xff] %vm151, %v138
  %158 = vst.msk [vmem:[%s2 + $0x30] sm:$0xff] %vm151, %v143
  %159 = vst.msk [vmem:[%s2 + $0x38] sm:$0xff] %vm151, %v148
  // Predicated region
  $region10: #{tpu_custom_call.1} parent=0 // pred_check
    _
  $region11: #{tpu_custom_call.1} parent=0 // pred_check_branch
    %161 = sbr.rel (0) target = $region13
  $region12: #{tpu_custom_call.1} parent=0 // pred_region
    _
  $region13: #{tpu_custom_call.1} parent=0 // pred_fallthru
    _
  // Predicated region
  $region14: #{tpu_custom_call.1} parent=0 // pred_check
    _
  $region15: #{tpu_custom_call.1} parent=0 // pred_check_branch
    %163 = sbr.rel (0) target = $region17
  $region16: #{tpu_custom_call.1} parent=0 // pred_region
    _
  $region17: #{tpu_custom_call.1} parent=0 // pred_fallthru
    _

</llo_original>
